<compile_context>
chip_gen: v7x
topology: tpu7x:2x2x1
jax: 0.10.0
libtpu: 0.0.40
codegen_flags: <defaults>
</compile_context>

<pallas_src>
import functools

import jax
import jax.numpy as jnp
from jax.experimental import pallas as pl
from jax.experimental.pallas import tpu as pltpu

_LANE = 128


def _vmem_budget_bytes():
    """VMEM limit for pallas_call: 3/4 of physical, capped at 96 MiB.

    -> 48 MiB on v7x (64 MiB/TC), 96 MiB on v5e/v6e (128 MiB).  Falls back to
    the v7x-safe 48 MiB if the hardware query is unavailable.
    """
    cap = 64 * 1024 * 1024
    try:
        cap = int(pltpu.get_tpu_info().vmem_capacity_bytes)
    except Exception:
        pass
    return int(min((cap * 3) // 4, 96 * 1024 * 1024))


def _rows_per_block(batch, row_bytes, target_bytes):
    """Batch rows per grid step.

    Targets ~`target_bytes` of input per block (long DMAs, ~0.35us/step
    overhead amortized) but also guarantees >= 4 grid steps (>= 2 per v7x
    TensorCore) whenever the batch allows, so both cores get work and each
    core's pipeline overlaps the DMA of block i+1 / writeback of i-1.
    """
    bb = int(max(1, target_bytes // max(int(row_bytes), 1)))
    if batch >= 4:
        bb = min(bb, int(pl.cdiv(batch, 4)))
    elif batch >= 2:
        bb = min(bb, int(pl.cdiv(batch, 2)))
    return int(max(1, min(bb, batch)))


# ----------------------------------------------------------------------------
# Kernels
# ----------------------------------------------------------------------------
def _revin_norm_folded_kernel(*refs, eps, affine, num_features):
    """Lane-dense path: x pre-reshaped to (B, T//r, r*C) with r*C == 128."""
    if affine:
        x_ref, w_ref, b_ref, y_ref, min_ref, max_ref = refs
    else:
        x_ref, y_ref, min_ref, max_ref = refs

    c = num_features
    x = x_ref[...]                                               # native dtype
    # min/max in the native dtype (exact for bf16); only the tiny per-channel
    # stats get cast to f32 — no full-tile f32 copy is kept live.
    mn = jnp.min(x, axis=1, keepdims=True).astype(jnp.float32)   # (Bb, 1, 128)
    mx = jnp.max(x, axis=1, keepdims=True).astype(jnp.float32)
    # Log-tree fold of the r channel-groups packed along the lane axis (XLU
    # rolls; wrap-around stays within the same channel since 128 % C == 0).
    # Afterwards every lane j holds the stat of channel j % C, i.e. the stats
    # are already broadcast in the folded layout.
    shift = c
    while shift < _LANE:
        mn = jnp.minimum(mn, pltpu.roll(mn, shift=shift, axis=2))
        mx = jnp.maximum(mx, pltpu.roll(mx, shift=shift, axis=2))
        shift *= 2
    inv = pl.reciprocal(mx - mn + eps, approx=False)             # (Bb, 1, 128)
    y = (x.astype(jnp.float32) - mn) * inv                       # casts fuse per-vreg
    if affine:
        y = y * w_ref[...] + b_ref[...]                          # pre-tiled (1,1,128)
    y_ref[...] = y.astype(y_ref.dtype)
    min_ref[...] = mn[:, :, :c]
    max_ref[...] = mx[:, :, :c]


def _revin_norm_kernel(*refs, eps, affine):
    """Generic path: block is (Bb, T, C) with T, C the full array dims."""
    if affine:
        x_ref, w_ref, b_ref, y_ref, min_ref, max_ref = refs
    else:
        x_ref, y_ref, min_ref, max_ref = refs

    x = x_ref[...]                                               # native dtype
    mn = jnp.min(x, axis=1, keepdims=True).astype(jnp.float32)   # (Bb, 1, C)
    mx = jnp.max(x, axis=1, keepdims=True).astype(jnp.float32)
    inv = pl.reciprocal(mx - mn + eps, approx=False)
    y = (x.astype(jnp.float32) - mn) * inv
    if affine:
        y = y * w_ref[...] + b_ref[...]
    y_ref[...] = y.astype(y_ref.dtype)
    min_ref[...] = mn
    max_ref[...] = mx


def _revin_denorm_kernel(*refs, eps, affine, col, src_col):
    """Denorm: closing-column select folded into the kernel (no wrapper slice)."""
    if affine:
        y_ref, min_ref, max_ref, w_ref, b_ref, out_ref = refs
    else:
        y_ref, min_ref, max_ref, out_ref = refs

    yc = y_ref[:, :, src_col:src_col + 1].astype(jnp.float32)    # (Bb, T, 1)
    if affine:
        w = w_ref[:, :, col:col + 1].astype(jnp.float32)          # (1, 1, 1)
        b = b_ref[:, :, col:col + 1].astype(jnp.float32)
        yc = (yc - b) * pl.reciprocal(w + eps, approx=False)
    cmin = min_ref[:, :, col:col + 1].astype(jnp.float32)         # (Bb, 1, 1)
    cmax = max_ref[:, :, col:col + 1].astype(jnp.float32)
    out_ref[...] = (yc * (cmax - cmin) + cmin).astype(out_ref.dtype)


# ----------------------------------------------------------------------------
# Module wrapper (JAX glue only; hot path is in the kernels above)
# ----------------------------------------------------------------------------
class RevIN:
    def __init__(self, indicators_list_01, num_features, eps=1e-05, affine=False):
        self.num_features = int(num_features)
        self.eps = float(eps)
        self.affine = bool(affine)
        self.indicators_list_01 = list(indicators_list_01)
        self.min_val = None
        self.max_val = None
        if self.affine:
            # torch: ones / zeros init (learnable Parameters there).
            self.affine_weight = jnp.ones((self.num_features,), jnp.float32)
            self.affine_bias = jnp.zeros((self.num_features,), jnp.float32)

    def set_statistics(self, min_val, max_val):
        self.min_val = min_val
        self.max_val = max_val

    def __call__(self, x, mode, min_val=None, max_val=None):
        if mode == "norm":
            y, mn, mx = self.norm(x)
            self.set_statistics(mn, mx)
            return y
        if mode == "denorm":
            mn = self.min_val if min_val is None else min_val
            mx = self.max_val if max_val is None else max_val
            return self.denorm(x, mn, mx)
        raise NotImplementedError

    # ---- mode == 'norm' -----------------------------------------------------
    def norm(self, x):
        B, T, C = x.shape
        assert C == self.num_features
        itemsize = jnp.dtype(x.dtype).itemsize
        vmem_limit = _vmem_budget_bytes()
        target = max(2 << 20, vmem_limit // 8)
        bb = _rows_per_block(B, T * C * itemsize, target)
        grid = (int(pl.cdiv(B, bb)),)

        nelem = B * T * C
        cost = pl.CostEstimate(
            flops=int(6 * nelem),
            transcendentals=int(B * C),
            bytes_accessed=int(2 * nelem * itemsize + 2 * B * C * 4))
        cparams = pltpu.CompilerParams(
            dimension_semantics=("parallel",),
            vmem_limit_bytes=vmem_limit)

        fold = (C <= _LANE) and (_LANE % C == 0) and (T % (_LANE // C) == 0)

        if fold:
            r = _LANE // C
            tf = T // r
            x_in = x.reshape(B, tf, _LANE)          # free bitcast (contiguous)
            in_specs = [pl.BlockSpec((bb, tf, _LANE), lambda i: (i, 0, 0))]
            args = [x_in]
            if self.affine:
                w = jnp.tile(self.affine_weight.astype(jnp.float32), r).reshape(1, 1, _LANE)
                b = jnp.tile(self.affine_bias.astype(jnp.float32), r).reshape(1, 1, _LANE)
                in_specs += [pl.BlockSpec((1, 1, _LANE), lambda i: (0, 0, 0)),
                             pl.BlockSpec((1, 1, _LANE), lambda i: (0, 0, 0))]
                args += [w, b]
            out_shape = (jax.ShapeDtypeStruct((B, tf, _LANE), x.dtype),
                         jax.ShapeDtypeStruct((B, 1, C), jnp.float32),
                         jax.ShapeDtypeStruct((B, 1, C), jnp.float32))
            out_specs = (pl.BlockSpec((bb, tf, _LANE), lambda i: (i, 0, 0)),
                         pl.BlockSpec((bb, 1, C), lambda i: (i, 0, 0)),
                         pl.BlockSpec((bb, 1, C), lambda i: (i, 0, 0)))
            kernel = functools.partial(_revin_norm_folded_kernel, eps=self.eps,
                                       affine=self.affine, num_features=C)
            y_f, mn, mx = pl.pallas_call(
                kernel, out_shape=out_shape, grid=grid,
                in_specs=in_specs, out_specs=out_specs,
                compiler_params=cparams, cost_estimate=cost)(*args)
            return y_f.reshape(B, T, C), mn, mx     # free bitcast back

        # Generic (lane-sparse) fallback for C not dividing 128 / ragged T.
        in_specs = [pl.BlockSpec((bb, T, C), lambda i: (i, 0, 0))]
        args = [x]
        if self.affine:
            w = self.affine_weight.reshape(1, 1, C).astype(jnp.float32)
            b = self.affine_bias.reshape(1, 1, C).astype(jnp.float32)
            in_specs += [pl.BlockSpec((1, 1, C), lambda i: (0, 0, 0)),
                         pl.BlockSpec((1, 1, C), lambda i: (0, 0, 0))]
            args += [w, b]
        out_shape = (jax.ShapeDtypeStruct((B, T, C), x.dtype),
                     jax.ShapeDtypeStruct((B, 1, C), jnp.float32),
                     jax.ShapeDtypeStruct((B, 1, C), jnp.float32))
        out_specs = (pl.BlockSpec((bb, T, C), lambda i: (i, 0, 0)),
                     pl.BlockSpec((bb, 1, C), lambda i: (i, 0, 0)),
                     pl.BlockSpec((bb, 1, C), lambda i: (i, 0, 0)))
        kernel = functools.partial(_revin_norm_kernel, eps=self.eps, affine=self.affine)
        return pl.pallas_call(
            kernel, out_shape=out_shape, grid=grid,
            in_specs=in_specs, out_specs=out_specs,
            compiler_params=cparams, cost_estimate=cost)(*args)

    # ---- mode == 'denorm' ---------------------------------------------------
    def denorm(self, y, min_val, max_val):
        col = sum(self.indicators_list_01[:-14]) + 4 - 1
        B, T, Cin = y.shape
        C = min_val.shape[-1]
        assert 0 <= col < C, "closing column index out of stats range"
        src_col = col if Cin > 1 else 0

        itemsize = jnp.dtype(y.dtype).itemsize
        vmem_limit = _vmem_budget_bytes()
        target = max(2 << 20, vmem_limit // 8)
        bb = _rows_per_block(B, T * Cin * itemsize, target)
        grid = (int(pl.cdiv(B, bb)),)

        min32 = min_val.astype(jnp.float32)
        max32 = max_val.astype(jnp.float32)
        in_specs = [pl.BlockSpec((bb, T, Cin), lambda i: (i, 0, 0)),
                    pl.BlockSpec((bb, 1, C), lambda i: (i, 0, 0)),
                    pl.BlockSpec((bb, 1, C), lambda i: (i, 0, 0))]
        args = [y, min32, max32]
        if self.affine:
            w = self.affine_weight.reshape(1, 1, -1).astype(jnp.float32)
            b = self.affine_bias.reshape(1, 1, -1).astype(jnp.float32)
            in_specs += [pl.BlockSpec((1, 1, w.shape[-1]), lambda i: (0, 0, 0)),
                         pl.BlockSpec((1, 1, b.shape[-1]), lambda i: (0, 0, 0))]
            args += [w, b]

        cost = pl.CostEstimate(
            flops=int(4 * B * T),
            transcendentals=1 if self.affine else 0,
            bytes_accessed=int(B * T * Cin * itemsize + B * T * itemsize + 2 * B * C * 4))

        kernel = functools.partial(_revin_denorm_kernel, eps=self.eps,
                                   affine=self.affine, col=col, src_col=src_col)
        return pl.pallas_call(
            kernel,
            out_shape=jax.ShapeDtypeStruct((B, T, 1), y.dtype),
            grid=grid,
            in_specs=in_specs,
            out_specs=pl.BlockSpec((bb, T, 1), lambda i: (i, 0, 0)),
            compiler_params=pltpu.CompilerParams(
                dimension_semantics=("parallel",),
                vmem_limit_bytes=vmem_limit),
            cost_estimate=cost,
        )(*args)


# ----------------------------------------------------------------------------
# Demo / correctness check
# ----------------------------------------------------------------------------
if __name__ == "__main__":
    key = jax.random.PRNGKey(0)
    eps = 1e-05
    indicators = [1, 1] + [0] * 14          # col_index = 2 + 4 - 1 = 5
    col = sum(indicators[:-14]) + 4 - 1

    # Case 0: C divides 128 and T % (128//C) == 0 -> lane-dense folded path.
    # Case 1: irregular C/T -> generic fallback (also hits a partial batch block).
    for case, (B, T, C) in enumerate([(2, 16, 8), (3, 10, 6)]):
        k = jax.random.fold_in(key, case)
        x = jax.random.normal(k, (B, T, C), jnp.float32) * 3.0 + 1.5
        revin = RevIN(indicators, num_features=C, eps=eps, affine=False)

        # mode='norm'
        y = revin(x, "norm")
        y = jax.block_until_ready(y)
        mn, mx = revin.min_val, revin.max_val

        # plain-JAX reference
        mn_ref = jnp.min(x, axis=1, keepdims=True)
        mx_ref = jnp.max(x, axis=1, keepdims=True)
        y_ref = (x - mn_ref) / (mx_ref - mn_ref + eps)
        assert y.shape == (B, T, C)
        assert mn.shape == (B, 1, C) and mx.shape == (B, 1, C)
        assert jnp.allclose(y, y_ref, atol=1e-5, rtol=1e-5)
        assert jnp.allclose(mn, mn_ref) and jnp.allclose(mx, mx_ref)

        # mode='denorm' (applied to the normalized tensor, as the module would)
        out = revin(y, "denorm")
        out = jax.block_until_ready(out)
        cmin = mn_ref[..., col:col + 1]
        cmax = mx_ref[..., col:col + 1]
        out_ref = (y * (cmax - cmin) + cmin)[..., col:col + 1]
        assert out.shape == (B, T, 1)
        assert jnp.allclose(out, out_ref, atol=1e-5, rtol=1e-5)

    print("KERNEL_OK")
</pallas_src>

<mosaic_0001>
module attributes {stable_mosaic.version = 11 : i64} {
  func.func @_revin_norm_folded_kernel(%arg0: i32, %arg1: memref<1x1x128xf32, #tpu.memory_space<vmem>>, %arg2: memref<1x1x128xf32, #tpu.memory_space<vmem>>, %arg3: memref<1x1x8xf32, #tpu.memory_space<vmem>>, %arg4: memref<1x1x8xf32, #tpu.memory_space<vmem>>) attributes {dimension_semantics = [#tpu.dimension_semantics<parallel>], iteration_bounds = array<i64: 2>, scalar_prefetch = 0 : i64, scratch_operands = 0 : i64, tpu.core_type = #tpu.core_type<tc>, window_params = [{transform_indices = @transform_0, window_bounds = array<i64: 1, 1, 128>}, {transform_indices = @transform_1, window_bounds = array<i64: 1, 1, 128>}, {transform_indices = @transform_2, window_bounds = array<i64: 1, 1, 8>}, {transform_indices = @transform_3, window_bounds = array<i64: 1, 1, 8>}]} {
    %c0 = arith.constant 0 : index
    %c0_0 = arith.constant 0 : index
    %c0_1 = arith.constant 0 : index
    %0 = vector.load %arg1[%c0, %c0_0, %c0_1] : memref<1x1x128xf32, #tpu.memory_space<vmem>>, vector<1x1x128xf32>
    %cst = arith.constant dense<0x7F800000> : vector<1x128xf32>
    %1 = vector.multi_reduction <minimumf>, %0, %cst [1] : vector<1x1x128xf32> to vector<1x128xf32>
    %2 = vector.shape_cast %1 : vector<1x128xf32> to vector<1x1x128xf32>
    %cst_2 = arith.constant dense<0xFF800000> : vector<1x128xf32>
    %3 = vector.multi_reduction <maximumf>, %0, %cst_2 [1] : vector<1x1x128xf32> to vector<1x128xf32>
    %4 = vector.shape_cast %3 : vector<1x128xf32> to vector<1x1x128xf32>
    %c8_i32 = arith.constant 8 : i32
    %5 = tpu.dynamic_rotate %2 by %c8_i32 dim 2 : vector<1x1x128xf32>, i32 -> vector<1x1x128xf32>
    %6 = arith.minimumf %2, %5 : vector<1x1x128xf32>
    %c8_i32_3 = arith.constant 8 : i32
    %7 = tpu.dynamic_rotate %4 by %c8_i32_3 dim 2 : vector<1x1x128xf32>, i32 -> vector<1x1x128xf32>
    %8 = arith.maximumf %4, %7 : vector<1x1x128xf32>
    %c16_i32 = arith.constant 16 : i32
    %9 = tpu.dynamic_rotate %6 by %c16_i32 dim 2 : vector<1x1x128xf32>, i32 -> vector<1x1x128xf32>
    %10 = arith.minimumf %6, %9 : vector<1x1x128xf32>
    %c16_i32_4 = arith.constant 16 : i32
    %11 = tpu.dynamic_rotate %8 by %c16_i32_4 dim 2 : vector<1x1x128xf32>, i32 -> vector<1x1x128xf32>
    %12 = arith.maximumf %8, %11 : vector<1x1x128xf32>
    %c32_i32 = arith.constant 32 : i32
    %13 = tpu.dynamic_rotate %10 by %c32_i32 dim 2 : vector<1x1x128xf32>, i32 -> vector<1x1x128xf32>
    %14 = arith.minimumf %10, %13 : vector<1x1x128xf32>
    %c32_i32_5 = arith.constant 32 : i32
    %15 = tpu.dynamic_rotate %12 by %c32_i32_5 dim 2 : vector<1x1x128xf32>, i32 -> vector<1x1x128xf32>
    %16 = arith.maximumf %12, %15 : vector<1x1x128xf32>
    %c64_i32 = arith.constant 64 : i32
    %17 = tpu.dynamic_rotate %14 by %c64_i32 dim 2 : vector<1x1x128xf32>, i32 -> vector<1x1x128xf32>
    %18 = arith.minimumf %14, %17 : vector<1x1x128xf32>
    %c64_i32_6 = arith.constant 64 : i32
    %19 = tpu.dynamic_rotate %16 by %c64_i32_6 dim 2 : vector<1x1x128xf32>, i32 -> vector<1x1x128xf32>
    %20 = arith.maximumf %16, %19 : vector<1x1x128xf32>
    %21 = arith.subf %20, %18 : vector<1x1x128xf32>
    %cst_7 = arith.constant 9.99999974E-6 : f32
    %22 = vector.broadcast %cst_7 : f32 to vector<1x1x128xf32>
    %23 = arith.addf %21, %22 : vector<1x1x128xf32>
    %24 = tpu.reciprocal %23 : vector<1x1x128xf32> -> vector<1x1x128xf32>
    %25 = arith.subf %0, %18 : vector<1x1x128xf32>
    %26 = arith.mulf %25, %24 : vector<1x1x128xf32>
    %c0_8 = arith.constant 0 : index
    %c0_9 = arith.constant 0 : index
    %c0_10 = arith.constant 0 : index
    %27 = vector.load %arg2[%c0_8, %c0_9, %c0_10] : memref<1x1x128xf32, #tpu.memory_space<vmem>>, vector<1x1x128xf32>
    tpu.vector_store %arg2[%c0_8, %c0_9, %c0_10], %26 {strides = array<i32>} : memref<1x1x128xf32, #tpu.memory_space<vmem>>, vector<1x1x128xf32>,
    %28 = vector.extract_strided_slice %18 {offsets = [0, 0, 0], sizes = [1, 1, 8], strides = [1, 1, 1]} : vector<1x1x128xf32> to vector<1x1x8xf32>
    %c0_11 = arith.constant 0 : index
    %c0_12 = arith.constant 0 : index
    %c0_13 = arith.constant 0 : index
    %29 = vector.load %arg3[%c0_11, %c0_12, %c0_13] : memref<1x1x8xf32, #tpu.memory_space<vmem>>, vector<1x1x8xf32>
    tpu.vector_store %arg3[%c0_11, %c0_12, %c0_13], %28 {strides = array<i32>} : memref<1x1x8xf32, #tpu.memory_space<vmem>>, vector<1x1x8xf32>,
    %30 = vector.extract_strided_slice %20 {offsets = [0, 0, 0], sizes = [1, 1, 8], strides = [1, 1, 1]} : vector<1x1x128xf32> to vector<1x1x8xf32>
    %c0_14 = arith.constant 0 : index
    %c0_15 = arith.constant 0 : index
    %c0_16 = arith.constant 0 : index
    %31 = vector.load %arg4[%c0_14, %c0_15, %c0_16] : memref<1x1x8xf32, #tpu.memory_space<vmem>>, vector<1x1x8xf32>
    tpu.vector_store %arg4[%c0_14, %c0_15, %c0_16], %30 {strides = array<i32>} : memref<1x1x8xf32, #tpu.memory_space<vmem>>, vector<1x1x8xf32>,
    return
  }
  func.func @transform_0(%arg0: i32) -> (i32, i32, i32) {
    %c0_i32 = arith.constant 0 : i32
    %c0_i32_0 = arith.constant 0 : i32
    %c0_i32_1 = arith.constant 0 : i32
    return %arg0, %c0_i32, %c0_i32_0 : i32, i32, i32
  }
  func.func @transform_1(%arg0: i32) -> (i32, i32, i32) {
    %c0_i32 = arith.constant 0 : i32
    %c0_i32_0 = arith.constant 0 : i32
    %c0_i32_1 = arith.constant 0 : i32
    return %arg0, %c0_i32, %c0_i32_0 : i32, i32, i32
  }
  func.func @transform_2(%arg0: i32) -> (i32, i32, i32) {
    %c0_i32 = arith.constant 0 : i32
    %c0_i32_0 = arith.constant 0 : i32
    %c0_i32_1 = arith.constant 0 : i32
    return %arg0, %c0_i32, %c0_i32_0 : i32, i32, i32
  }
  func.func @transform_3(%arg0: i32) -> (i32, i32, i32) {
    %c0_i32 = arith.constant 0 : i32
    %c0_i32_0 = arith.constant 0 : i32
    %c0_i32_1 = arith.constant 0 : i32
    return %arg0, %c0_i32, %c0_i32_0 : i32, i32, i32
  }
}

</mosaic_0001>

<llo_original>
// kernel: tpu_custom_call.1
$region0: #{tpu_custom_call.1}
  #allocation0 [shape = 'u32[]', space=smem, size = 0x4, offset = 0x4, fixed_abs, tag = 'smem constant byte address 0x4 - core index']
  #allocation1 [shape = 'u32[144,128]{1,0:T(1,128)}', space=vmem, size = 0x12000, scoped, tag = 'internal scratch']
  %s0 = inlined_call_operand.hbm [shape: f32[2,1,128], index: 0, kind: input, shape index: {}]
  %s1 = inlined_call_operand.hbm [shape: f32[2,1,128], index: 1, kind: output, shape index: {0}]
  %s2 = inlined_call_operand.hbm [shape: f32[2,1,8], index: 2, kind: output, shape index: {1}]
  %s3 = inlined_call_operand.hbm [shape: f32[2,1,8], index: 3, kind: output, shape index: {2}]
  %4 = xla_tuple %s1, %s2, %s3
  %s5 = sld [smem:[#allocation0]]
  $region57: #{tpu_custom_call.1} parent=0
    _
  %s7 = ssub.s32 1, %s5
  %s8 = scalar_select 0, %s7, %s5
  $region1: #{tpu_custom_call.1} parent=0
    #allocation2 [shape = 'u8[1024]{0}', space=vmem, size = 0x400, scoped, tag = 'input window, operand 0']
    #allocation3 [shape = 's32[2]{0}', space=sflag, size = 0x8, scoped, tag = 'scoped memory for tpu_custom_call.1']
    #allocation4 [shape = 's32[2]{0}', space=sflag, size = 0x8, scoped, tag = 'scoped memory for tpu_custom_call.1']
    #allocation5 [shape = 'u8[1024]{0}', space=vmem, size = 0x400, scoped, tag = 'output window, operand 0']
    #allocation6 [shape = 'u8[1024]{0}', space=vmem, size = 0x400, scoped, tag = 'output window, operand 1']
    #allocation7 [shape = 's32[2]{0}', space=sflag, size = 0x8, scoped, tag = 'scoped memory for tpu_custom_call.1']
    #allocation8 [shape = 'u8[1024]{0}', space=vmem, size = 0x400, scoped, tag = 'output window, operand 2']
    %9 = vsyncpa [#allocation3], 0
    %s10 = scalar_lea.sflag [#allocation3], 1
    %11 = vsyncpa %s10, 0
    %12 = vsyncpa [#allocation4], 0
    %s13 = scalar_lea.sflag [#allocation4], 1
    %14 = vsyncpa %s13, 0
    %15 = vsyncpa [#allocation7], 0
    %s16 = scalar_lea.sflag [#allocation7], 1
    %17 = vsyncpa %s16, 0
    loop: start=0, step=1, limit=4
    $region2: #{tpu_custom_call.1} parent=1 // loop_pre_header
      _
    $region3: #{tpu_custom_call.1} parent=1 // loop_header
      %s19 = sphi 0, %s23
      %p20 = scmp.ge.s32.totalorder %s19, 4
      %s29 = sphi 0, %s31
      %s32 = sphi 0, %s29
      %s33 = sphi 0, %s32
      %s49 = sphi 0, %s33
      %s55 = sphi 0, %s57
      %s58 = sphi 0, %s55
      %s59 = sphi 0, %s58
      %s75 = sphi 0, %s59
      %s81 = sphi 0, %s83
      %s84 = sphi 0, %s81
      %s85 = sphi 0, %s84
      %s101 = sphi 0, %s85
      %s107 = sphi 0, %s109
      %s110 = sphi 0, %s107
      %s111 = sphi 0, %s110
      %s127 = sphi 0, %s111
    $region4: #{tpu_custom_call.1} parent=1 // loop_header_branch
      %22 = sbr.rel (%p20) target = $region8
    $region5: #{tpu_custom_call.1} parent=1 // loop_body
      %s24 = ssub.s32 %s19, 1
      %s25 = ssub.s32 %s19, 2
      %s26 = sadd.s32 %s19, 1
      %s27 = ssub.s32 %s19, %s26
      %p28 = scmp.eq.s32.totalorder %s27, 0
      %s30 = sadd.s32 %s29, 1
      %s31 = scalar_select %p28, %s29, %s30
      %p34 = pneg %p28
      %p35 = scmp.eq.s32.totalorder %s19, 1
      %p36 = por %p34, %p35
      %p37 = scmp.ne.s32.totalorder %s29, %s32
      %p38 = scmp.eq.s32.totalorder %s19, 0
      %p39 = por %p37, %p38
      %p40 = scmp.ne.s32.totalorder %s29, %s32
      %p41 = scmp.eq.s32.totalorder %s24, 1
      %p42 = por %p40, %p41
      %p43 = scmp.ne.s32.totalorder %s32, %s33
      %p44 = scmp.eq.s32.totalorder %s24, 0
      %p45 = por %p43, %p44
      %p46 = scmp.ne.s32.totalorder %s32, %s33
      %p47 = scmp.eq.s32.totalorder %s25, 1
      %p48 = por %p46, %p47
      %p50 = scmp.ne.s32.totalorder %s33, %s49
      %p51 = scmp.eq.s32.totalorder %s25, 0
      %p52 = por %p50, %p51
      %s53 = ssub.s32 %s19, %s26
      %p54 = scmp.eq.s32.totalorder %s53, 0
      %s56 = sadd.s32 %s55, 1
      %s57 = scalar_select %p54, %s55, %s56
      %p60 = pneg %p54
      %p61 = scmp.eq.s32.totalorder %s19, 1
      %p62 = por %p60, %p61
      %p63 = scmp.ne.s32.totalorder %s55, %s58
      %p64 = scmp.eq.s32.totalorder %s19, 0
      %p65 = por %p63, %p64
      %p66 = scmp.ne.s32.totalorder %s55, %s58
      %p67 = scmp.eq.s32.totalorder %s24, 1
      %p68 = por %p66, %p67
      %p69 = scmp.ne.s32.totalorder %s58, %s59
      %p70 = scmp.eq.s32.totalorder %s24, 0
      %p71 = por %p69, %p70
      %p72 = scmp.ne.s32.totalorder %s58, %s59
      %p73 = scmp.eq.s32.totalorder %s25, 1
      %p74 = por %p72, %p73
      %p76 = scmp.ne.s32.totalorder %s59, %s75
      %p77 = scmp.eq.s32.totalorder %s25, 0
      %p78 = por %p76, %p77
      %s79 = ssub.s32 %s19, %s26
      %p80 = scmp.eq.s32.totalorder %s79, 0
      %s82 = sadd.s32 %s81, 1
      %s83 = scalar_select %p80, %s81, %s82
      %p86 = pneg %p80
      %p87 = scmp.eq.s32.totalorder %s19, 1
      %p88 = por %p86, %p87
      %p89 = scmp.ne.s32.totalorder %s81, %s84
      %p90 = scmp.eq.s32.totalorder %s19, 0
      %p91 = por %p89, %p90
      %p92 = scmp.ne.s32.totalorder %s81, %s84
      %p93 = scmp.eq.s32.totalorder %s24, 1
      %p94 = por %p92, %p93
      %p95 = scmp.ne.s32.totalorder %s84, %s85
      %p96 = scmp.eq.s32.totalorder %s24, 0
      %p97 = por %p95, %p96
      %p98 = scmp.ne.s32.totalorder %s84, %s85
      %p99 = scmp.eq.s32.totalorder %s25, 1
      %p100 = por %p98, %p99
      %p102 = scmp.ne.s32.totalorder %s85, %s101
      %p103 = scmp.eq.s32.totalorder %s25, 0
      %p104 = por %p102, %p103
      %s105 = ssub.s32 %s19, %s26
      %p106 = scmp.eq.s32.totalorder %s105, 0
      %s108 = sadd.s32 %s107, 1
      %s109 = scalar_select %p106, %s107, %s108
      %p112 = pneg %p106
      %p113 = scmp.eq.s32.totalorder %s19, 1
      %p114 = por %p112, %p113
      %p115 = scmp.ne.s32.totalorder %s107, %s110
      %p116 = scmp.eq.s32.totalorder %s19, 0
      %p117 = por %p115, %p116
      %p118 = scmp.ne.s32.totalorder %s107, %s110
      %p119 = scmp.eq.s32.totalorder %s24, 1
      %p120 = por %p118, %p119
      %p121 = scmp.ne.s32.totalorder %s110, %s111
      %p122 = scmp.eq.s32.totalorder %s24, 0
      %p123 = por %p121, %p122
      %p124 = scmp.ne.s32.totalorder %s110, %s111
      %p125 = scmp.eq.s32.totalorder %s25, 1
      %p126 = por %p124, %p125
      %p128 = scmp.ne.s32.totalorder %s111, %s127
      %p129 = scmp.eq.s32.totalorder %s25, 0
      %p130 = por %p128, %p129
      %p131 = scmp.le.s32.totalorder 1, %s19
      %p132 = scmp.lt.s32.totalorder %s19, 3
      %p133 = pnand %p131, %p132
      %p134 = pneg %p133
      // Predicated region
      $region9: #{tpu_custom_call.1} parent=5 // pred_check
        _
      $region10: #{tpu_custom_call.1} parent=5 // pred_check_branch
        %136 = sbr.rel (%p133) target = $region12
      $region11: #{tpu_custom_call.1} parent=5 // pred_region
        %s137 = ssub.s32 %s19, 1
      $region12: #{tpu_custom_call.1} parent=5 // pred_fallthru
        _
      %p138 = scmp.lt.s32.totalorder %s19, 2
      // Predicated region
      $region13: #{tpu_custom_call.1} parent=5 // pred_check
        %p139 = pneg %p138
      $region14: #{tpu_custom_call.1} parent=5 // pred_check_branch
        %141 = sbr.rel (%p139) target = $region16
      $region15: #{tpu_custom_call.1} parent=5 // pred_region
        // Predicated region
        $region17: #{tpu_custom_call.1} parent=15 // pred_check
          %p142 = pneg %p39
        $region18: #{tpu_custom_call.1} parent=15 // pred_check_branch
          %144 = sbr.rel (%p142) target = $region20
        $region19: #{tpu_custom_call.1} parent=15 // pred_region
          %s145 = sand.u32 %s29, 1
          %s146 = scalar_lea.sflag [#allocation3], %s145
          %s147 = sand.u32 %s29, 1
          %s148 = scalar_lea.vmem [#allocation2], %s147
          %s150 = ssub.s32 16, 16
          %151 = vsyncadd %s146, %s150
          %s152 = smul.addr %s19, 16
          %s153 = scalar_lea.hbm %s0, %s152
          %s155 = sshll.u32 %s148, 4
          %s156 = int_to_ptr.vmem [resolvable:$true] %s155
          %158 = dma.hbm_to_vmem [thread:$0]  %s153, 16, %s156, %s146
        $region20: #{tpu_custom_call.1} parent=15 // pred_fallthru
          _
      $region16: #{tpu_custom_call.1} parent=5 // pred_fallthru
        _
      %p159 = scmp.le.s32.totalorder 1, %s19
      %p160 = scmp.lt.s32.totalorder %s19, 3
      %p161 = pnand %p159, %p160
      %p162 = pneg %p161
      // Predicated region
      $region21: #{tpu_custom_call.1} parent=5 // pred_check
        _
      $region22: #{tpu_custom_call.1} parent=5 // pred_check_branch
        %164 = sbr.rel (%p161) target = $region24
      $region23: #{tpu_custom_call.1} parent=5 // pred_region
        %s165 = ssub.s32 %s19, 1
        %s166 = sand.u32 %s32, 1
        %s167 = scalar_lea.sflag [#allocation3], %s166
        %s168 = sand.u32 %s32, 1
        %s169 = scalar_lea.vmem [#allocation2], %s168
        // Predicated region
        $region25: #{tpu_custom_call.1} parent=23 // pred_check
          %p170 = pneg %p45
        $region26: #{tpu_custom_call.1} parent=23 // pred_check_branch
          %172 = sbr.rel (%p170) target = $region28
        $region27: #{tpu_custom_call.1} parent=23 // pred_region
          %173 = dma.done %s167, 16
        $region28: #{tpu_custom_call.1} parent=23 // pred_fallthru
          _
        %s174 = sand.u32 %s32, 1
        %s175 = scalar_lea.sflag [#allocation3], %s174
        %s176 = sand.u32 %s32, 1
        %s177 = scalar_lea.vmem [#allocation2], %s176
        %p178 = pneg %p45
        %p179 = pneg %p42
        %p180 = pneg %p71
        %p181 = pneg %p68
        %s182 = sand.u32 %s58, 1
        %s183 = scalar_lea.sflag [#allocation4], %s182
        %s184 = sand.u32 %s58, 1
        %s185 = scalar_lea.vmem [#allocation5], %s184
        %p186 = pneg %p97
        %p187 = pneg %p94
        %s188 = sand.u32 %s24, 1
        %s189 = scalar_lea.sflag [#allocation7], %s188
        %s190 = sand.u32 %s84, 1
        %s191 = scalar_lea.vmem [#allocation6], %s190
        %p192 = pneg %p123
        %p193 = pneg %p120
        %s194 = sand.u32 %s24, 1
        %s195 = scalar_lea.sflag [#allocation7], %s194
        %s196 = sand.u32 %s110, 1
        %s197 = scalar_lea.vmem [#allocation8], %s196
        %v198 = vld [vmem:[%s169] sm:$0x1]
        %199 = vrot.lane.b32.xlu0 %v198, 8
        %v200 = vpop.permute.xlu0 %199
        %v201 = vmin.f32 %v198, %v200
        %v202 = vmax.f32 %v198, %v200
        %203 = vrot.lane.b32.xlu0 %v201, 16
        %v204 = vpop.permute.xlu0 %203
        %v205 = vmin.f32 %v201, %v204
        %206 = vrot.lane.b32.xlu0 %v202, 16
        %v207 = vpop.permute.xlu0 %206
        %v208 = vmax.f32 %v202, %v207
        %209 = vrot.lane.b32.xlu0 %v205, 32
        %v210 = vpop.permute.xlu0 %209
        %v211 = vmin.f32 %v205, %v210
        %212 = vrot.lane.b32.xlu0 %v208, 32
        %v213 = vpop.permute.xlu0 %212
        %v214 = vmax.f32 %v208, %v213
        %215 = vrot.lane.b32.xlu0 %v211, 64
        %v216 = vpop.permute.xlu0 %215
        %v217 = vmin.f32 %v211, %v216
        %218 = vrot.lane.b32.xlu0 %v214, 64
        %v219 = vpop.permute.xlu0 %218
        %v220 = vmax.f32 %v214, %v219
        %v221 = vsub.f32 %v220, %v217
        %v222 = vadd.f32 %v221, 1e-05
        %v223 = vrcp.pop %v222
        %v224 = vsub.f32 %v198, %v217
        %v225 = vmul.f32 %v224, %v223
        %226 = vst [vmem:[%s185] sm:$0x1] %v225
        %vm227 = vcmask 57344
        %228 = vst.msk [vmem:[%s191] sm:$0x1] %vm227, %v217
        %229 = vst.msk [vmem:[%s197] sm:$0x1] %vm227, %v220
        %s230 = sand.u32 %s58, 1
        %s231 = scalar_lea.sflag [#allocation4], %s230
        %s232 = sand.u32 %s58, 1
        %s233 = scalar_lea.vmem [#allocation5], %s232
        %s234 = sand.u32 %s24, 1
        %s235 = scalar_lea.sflag [#allocation7], %s234
        %s236 = sand.u32 %s84, 1
        %s237 = scalar_lea.vmem [#allocation6], %s236
        %s238 = sand.u32 %s24, 1
        %s239 = scalar_lea.sflag [#allocation7], %s238
        %s240 = sand.u32 %s110, 1
        %s241 = scalar_lea.vmem [#allocation8], %s240
        // Predicated region
        $region29: #{tpu_custom_call.1} parent=23 // pred_check
          %p242 = pneg %p68
        $region30: #{tpu_custom_call.1} parent=23 // pred_check_branch
          %244 = sbr.rel (%p242) target = $region32
        $region31: #{tpu_custom_call.1} parent=23 // pred_region
          %s246 = ssub.s32 16, 16
          %247 = vsyncadd %s231, %s246
          %s248 = smul.addr %s24, 16
          %s249 = scalar_lea.hbm %s1, %s248
          %s251 = sshll.u32 %s233, 4
          %s252 = int_to_ptr.vmem [resolvable:$true] %s251
          %254 = dma.vmem_to_hbm [thread:$0]  %s252, 16, %s249, %s231
        $region32: #{tpu_custom_call.1} parent=23 // pred_fallthru
          _
        // Predicated region
        $region33: #{tpu_custom_call.1} parent=23 // pred_check
          %p255 = pneg %p94
        $region34: #{tpu_custom_call.1} parent=23 // pred_check_branch
          %257 = sbr.rel (%p255) target = $region36
        $region35: #{tpu_custom_call.1} parent=23 // pred_region
          %s259 = ssub.s32 16, 16
          %260 = vsyncadd %s235, %s259
          %s261 = smul.addr %s24, 16
          %s262 = scalar_lea.hbm %s2, %s261
          %s264 = sshll.u32 %s237, 4
          %s265 = int_to_ptr.vmem [resolvable:$true] %s264
          %267 = dma.vmem_to_hbm [thread:$0]  %s265, 16, %s262, %s235
        $region36: #{tpu_custom_call.1} parent=23 // pred_fallthru
          _
        // Predicated region
        $region37: #{tpu_custom_call.1} parent=23 // pred_check
          %p268 = pneg %p120
        $region38: #{tpu_custom_call.1} parent=23 // pred_check_branch
          %270 = sbr.rel (%p268) target = $region40
        $region39: #{tpu_custom_call.1} parent=23 // pred_region
          %s272 = ssub.s32 16, 16
          %273 = vsyncadd %s239, %s272
          %s274 = smul.addr %s24, 16
          %s275 = scalar_lea.hbm %s3, %s274
          %s277 = sshll.u32 %s241, 4
          %s278 = int_to_ptr.vmem [resolvable:$true] %s277
          %280 = dma.vmem_to_hbm [thread:$0]  %s278, 16, %s275, %s239
        $region40: #{tpu_custom_call.1} parent=23 // pred_fallthru
          _
      $region24: #{tpu_custom_call.1} parent=5 // pred_fallthru
        _
      %p281 = scmp.le.s32.totalorder 2, %s19
      // Predicated region
      $region41: #{tpu_custom_call.1} parent=5 // pred_check
        %p282 = pneg %p281
      $region42: #{tpu_custom_call.1} parent=5 // pred_check_branch
        %284 = sbr.rel (%p282) target = $region44
      $region43: #{tpu_custom_call.1} parent=5 // pred_region
        %s285 = ssub.s32 %s19, 2
        // Predicated region
        $region45: #{tpu_custom_call.1} parent=43 // pred_check
          %p286 = pneg %p74
        $region46: #{tpu_custom_call.1} parent=43 // pred_check_branch
          %288 = sbr.rel (%p286) target = $region48
        $region47: #{tpu_custom_call.1} parent=43 // pred_region
          %s289 = sand.u32 %s59, 1
          %s290 = scalar_lea.sflag [#allocation4], %s289
          %s291 = sand.u32 %s59, 1
          %s292 = scalar_lea.vmem [#allocation5], %s291
          %293 = dma.done %s290, 16
        $region48: #{tpu_custom_call.1} parent=43 // pred_fallthru
          _
        // Predicated region
        $region49: #{tpu_custom_call.1} parent=43 // pred_check
          %p294 = pneg %p100
        $region50: #{tpu_custom_call.1} parent=43 // pred_check_branch
          %296 = sbr.rel (%p294) target = $region52
        $region51: #{tpu_custom_call.1} parent=43 // pred_region
          %s297 = sand.u32 %s25, 1
          %s298 = scalar_lea.sflag [#allocation7], %s297
          %s299 = sand.u32 %s85, 1
          %s300 = scalar_lea.vmem [#allocation6], %s299
          %301 = dma.done %s298, 16
        $region52: #{tpu_custom_call.1} parent=43 // pred_fallthru
          _
        // Predicated region
        $region53: #{tpu_custom_call.1} parent=43 // pred_check
          %p302 = pneg %p126
        $region54: #{tpu_custom_call.1} parent=43 // pred_check_branch
          %304 = sbr.rel (%p302) target = $region56
        $region55: #{tpu_custom_call.1} parent=43 // pred_region
          %s305 = sand.u32 %s25, 1
          %s306 = scalar_lea.sflag [#allocation7], %s305
          %s307 = sand.u32 %s111, 1
          %s308 = scalar_lea.vmem [#allocation8], %s307
          %309 = dma.done %s306, 16
        $region56: #{tpu_custom_call.1} parent=43 // pred_fallthru
          _
      $region44: #{tpu_custom_call.1} parent=5 // pred_fallthru
        _
    $region6: #{tpu_custom_call.1} parent=1 // loop_footer
      %s23 = sadd.s32 1, %s19
    $region7: #{tpu_custom_call.1} parent=1 // loop_footer_branch
      %18 = sbr.rel target = $region3
    $region8: #{tpu_custom_call.1} parent=1 // loop_exit
      _
    %310 = vsyncpa [#allocation3], 1
    %s311 = scalar_lea.sflag [#allocation3], 1
    %312 = vsyncpa %s311, 1
    %313 = vsyncpa [#allocation4], 1
    %s314 = scalar_lea.sflag [#allocation4], 1
    %315 = vsyncpa %s314, 1
    %316 = vsyncpa [#allocation7], 1
    %s317 = scalar_lea.sflag [#allocation7], 1
    %318 = vsyncpa %s317, 1

</llo_original>
